<compile_context>
chip_gen: v7x
topology: tpu7x:2x2x1
jax: 0.10.0
libtpu: 0.0.40
codegen_flags: <defaults>
</compile_context>

<pallas_src>
import functools

import jax
import jax.numpy as jnp
from jax.experimental import pallas as pl
from jax.experimental.pallas import tpu as pltpu

LANES = 128      # lane width of a vreg
SUBLANES = 8     # f32 sublanes of a vreg
MAX_TM = 2048    # rows of 128 lanes per grid step -> 262,144 points/step,
                 # (3*TM*128 + TM*128) f32 double-buffered ~= 8 MiB VMEM.


# ----------------------------- Pallas kernels -----------------------------
# pts_ref: (3, TM, 128) f32 VMEM block (packed SoA).
# prm_ref: flat f32 SMEM parameter vector (scalar reads).
# out_ref: (TM, 128) f32 VMEM block (lane + sublane dense).

def _sphere_kernel(pts_ref, prm_ref, out_ref):
    # prm = [cx, cy, cz, radius]
    d0 = pts_ref[0] - prm_ref[0]
    d1 = pts_ref[1] - prm_ref[1]
    d2 = pts_ref[2] - prm_ref[2]
    out_ref[...] = jnp.sqrt(d0 * d0 + d1 * d1 + d2 * d2) - prm_ref[3]


def _box_kernel(pts_ref, prm_ref, out_ref):
    # prm = [cx, cy, cz, hx, hy, hz]  (half side lengths pre-folded host-side)
    d0 = jnp.abs(pts_ref[0] - prm_ref[0]) - prm_ref[3]
    d1 = jnp.abs(pts_ref[1] - prm_ref[1]) - prm_ref[4]
    d2 = jnp.abs(pts_ref[2] - prm_ref[2]) - prm_ref[5]
    p0 = jnp.maximum(d0, 0.0)
    p1 = jnp.maximum(d1, 0.0)
    p2 = jnp.maximum(d2, 0.0)
    outside = jnp.sqrt(p0 * p0 + p1 * p1 + p2 * p2)
    inside = jnp.minimum(jnp.maximum(jnp.maximum(d0, d1), d2), 0.0)
    out_ref[...] = outside + inside


def _torus_kernel(pts_ref, prm_ref, out_ref):
    # prm = [cx, cy, cz, R_major, r_minor]
    d0 = pts_ref[0] - prm_ref[0]
    d1 = pts_ref[1] - prm_ref[1]
    d2 = pts_ref[2] - prm_ref[2]
    q0 = jnp.sqrt(d0 * d0 + d1 * d1) - prm_ref[3]
    out_ref[...] = jnp.sqrt(q0 * q0 + d2 * d2) - prm_ref[4]


_KERNELS = {"sphere": _sphere_kernel, "box": _box_kernel, "torus": _torus_kernel}


# ------------------------------ JAX wrappers -------------------------------

def _run_sdf_kernel(pts_packed, params, sdf_type):
    """pts_packed: (3, M, 128) f32 packed points (M multiple of 8);
    params: flat (k,) f32 SMEM vector.  Returns (M, 128) f32 distances."""
    m = pts_packed.shape[1]
    tm = min(MAX_TM, m)                      # TM is a multiple of 8 (M is)
    grid = (pl.cdiv(m, tm),)                 # no forced >=2 steps (single-TC parts)
    return pl.pallas_call(
        _KERNELS[sdf_type],
        out_shape=jax.ShapeDtypeStruct((m, LANES), jnp.float32),
        grid_spec=pltpu.PrefetchScalarGridSpec(
            num_scalar_prefetch=0,
            grid=grid,
            in_specs=[
                pl.BlockSpec((3, tm, LANES), lambda i: (0, i, 0)),
                pl.BlockSpec(memory_space=pltpu.MemorySpace.SMEM),
            ],
            out_specs=pl.BlockSpec((tm, LANES), lambda i: (i, 0)),
        ),
        compiler_params=pltpu.CompilerParams(
            dimension_semantics=("parallel",)),
    )(pts_packed, params)


@functools.partial(jax.jit, static_argnames=("sdf_type",))
def _sdf_distance(points, params, sdf_type):
    """AoS path: (..., 3) points -> (N, 1) distances.
    Cast + transpose + pad + reshape fuse into ONE materialization under jit."""
    pts = jnp.reshape(points, (-1, 3)).astype(jnp.float32)          # (N, 3)
    n = pts.shape[0]
    m = pl.cdiv(max(n, 1), LANES * SUBLANES) * SUBLANES              # rows, mult of 8
    n_pad = m * LANES
    pts_packed = jnp.pad(pts.T, ((0, 0), (0, n_pad - n))).reshape(3, m, LANES)
    out = _run_sdf_kernel(pts_packed, params, sdf_type)              # (m, 128)
    return out.reshape(n_pad, 1)[:n]                                 # contiguous, free


@functools.partial(jax.jit, static_argnames=("sdf_type",))
def _sdf_distance_packed(pts_packed, params, sdf_type):
    """Packed fast path: (3, M, 128) points -> (M, 128) distances (no transpose pass)."""
    return _run_sdf_kernel(pts_packed.astype(jnp.float32), params, sdf_type)


class SDFSurfaceJAX:
    """JAX/Pallas port of SDFSurface (forward == get_distance)."""

    def __init__(self, sdf_type="sphere",
                 center=(0.25, -0.1, 0.3),
                 radius=1.0,
                 side_lengths=(1.5, 1.0, 0.8),
                 radii=(1.0, 0.25),
                 feature_dim=3):
        assert sdf_type in _KERNELS, f"unsupported sdf type {sdf_type}"
        self.sdf_type = sdf_type
        # Deterministic parameter init (mirrors the PyTorch Parameter shapes).
        self.center = jnp.asarray(center, jnp.float32).reshape(1, 3)
        self.radius = jnp.asarray(radius, jnp.float32).reshape(())
        self.side_lengths = jnp.asarray(side_lengths, jnp.float32).reshape(1, 3)
        self.radii = jnp.asarray(radii, jnp.float32).reshape(1, 2)
        # feature param exists in the module but is unused in forward().
        self.feature = jnp.ones((1, feature_dim), jnp.float32)

        c = self.center.reshape(3)
        if sdf_type == "sphere":
            self._params = jnp.concatenate([c, self.radius.reshape(1)])            # (4,)
        elif sdf_type == "box":
            # fold the /2 into the params (half extents) -> no *0.5 in-kernel
            self._params = jnp.concatenate([c, self.side_lengths.reshape(3) * 0.5])  # (6,)
        else:  # torus
            self._params = jnp.concatenate([c, self.radii.reshape(2)])              # (5,)

    def __call__(self, points):
        return self.get_distance(points)

    def get_distance(self, points):
        """points: (..., 3) array -> (N, 1) signed distances."""
        return _sdf_distance(points, self._params, self.sdf_type)

    def get_distance_packed(self, pts_packed):
        """pts_packed: (3, M, 128) packed points -> (M, 128) signed distances.
        Primary high-throughput API: skips the AoS->packed transpose HBM pass."""
        return _sdf_distance_packed(pts_packed, self._params, self.sdf_type)


# TODO(synk): MarvelCubeSDF / TrippySDF composites (min/max over many primitive
# SDFs) and the get_textures/get_color paths are not kernelized here; when they
# are, all primitives + the min/max combine should be fused into ONE kernel per
# tile to avoid re-reading the point stream per primitive.


# ------------------------------ references --------------------------------

def _sphere_ref(pts, center, radius):
    return jnp.linalg.norm(pts - center, axis=-1, keepdims=True) - radius


def _box_ref(pts, center, side):
    diff = jnp.abs(pts - center) - side / 2.0
    sd = (jnp.linalg.norm(jnp.maximum(diff, 0.0), axis=-1)
          + jnp.minimum(jnp.max(diff, axis=-1), 0.0))
    return sd[:, None]


def _torus_ref(pts, center, radii):
    diff = pts - center
    q0 = jnp.linalg.norm(diff[..., :2], axis=-1) - radii[0, 0]
    q1 = diff[..., -1]
    return (jnp.sqrt(q0 * q0 + q1 * q1) - radii[0, 1])[:, None]


# --------------------------------- main ------------------------------------

if __name__ == "__main__":
    key = jax.random.PRNGKey(0)
    # points: a small ray-march style batch, (B, H, W, 3) -> N = 512 points
    points = jax.random.normal(key, (2, 16, 16, 3), dtype=jnp.float32) * 1.5
    pts_flat = points.reshape(-1, 3)

    # sphere (default cfg.sdf.type)
    surf_sphere = SDFSurfaceJAX("sphere")
    d_sphere = jax.block_until_ready(surf_sphere(points))
    ref_sphere = _sphere_ref(pts_flat, surf_sphere.center, surf_sphere.radius)
    assert d_sphere.shape == (pts_flat.shape[0], 1)
    assert jnp.allclose(d_sphere, ref_sphere, atol=1e-5, rtol=1e-5)

    # box
    surf_box = SDFSurfaceJAX("box")
    d_box = jax.block_until_ready(surf_box(points))
    ref_box = _box_ref(pts_flat, surf_box.center, surf_box.side_lengths)
    assert jnp.allclose(d_box, ref_box, atol=1e-5, rtol=1e-5)

    # torus
    surf_torus = SDFSurfaceJAX("torus")
    d_torus = jax.block_until_ready(surf_torus(points))
    ref_torus = _torus_ref(pts_flat, surf_torus.center, surf_torus.radii)
    assert jnp.allclose(d_torus, ref_torus, atol=1e-5, rtol=1e-5)

    # ragged N (not a multiple of 128 / 1024) exercises the padded tail
    key2 = jax.random.PRNGKey(1)
    points_ragged = jax.random.normal(key2, (3, 9, 13, 3), dtype=jnp.float32)
    pts_ragged = points_ragged.reshape(-1, 3)
    d_rag = jax.block_until_ready(surf_sphere(points_ragged))
    ref_rag = _sphere_ref(pts_ragged, surf_sphere.center, surf_sphere.radius)
    assert d_rag.shape == (pts_ragged.shape[0], 1)
    assert jnp.allclose(d_rag, ref_rag, atol=1e-5, rtol=1e-5)

    # packed fast path (caller keeps the (3, M, 128) layout, no transpose pass)
    key3 = jax.random.PRNGKey(2)
    pts_big = jax.random.normal(key3, (1024, 3), dtype=jnp.float32) * 2.0
    pts_packed = pts_big.T.reshape(3, 1024 // LANES, LANES)          # (3, 8, 128)
    d_packed = jax.block_until_ready(surf_sphere.get_distance_packed(pts_packed))
    assert d_packed.shape == (1024 // LANES, LANES)
    ref_packed = _sphere_ref(pts_big, surf_sphere.center, surf_sphere.radius)
    assert jnp.allclose(d_packed.reshape(-1, 1), ref_packed, atol=1e-5, rtol=1e-5)

    print("KERNEL_OK")
</pallas_src>

<mosaic_0001>
module attributes {stable_mosaic.version = 11 : i64} {
  func.func @_sphere_kernel(%arg0: i32, %arg1: memref<3x8x128xf32, #tpu.memory_space<vmem>>, %arg2: memref<4xf32, #tpu.memory_space<smem>>, %arg3: memref<8x128xf32, #tpu.memory_space<vmem>>) attributes {dimension_semantics = [#tpu.dimension_semantics<parallel>], iteration_bounds = array<i64: 1>, scalar_prefetch = 0 : i64, scratch_operands = 0 : i64, tpu.core_type = #tpu.core_type<tc>, window_params = [{transform_indices = @transform_0, window_bounds = array<i64: 3, 8, 128>}, {transform_indices = @transform_1, window_bounds = array<i64: 4>}, {transform_indices = @transform_2, window_bounds = array<i64: 8, 128>}]} {
    %c0 = arith.constant 0 : index
    %c0_0 = arith.constant 0 : index
    %c0_1 = arith.constant 0 : index
    %0 = vector.load %arg1[%c0, %c0_0, %c0_1] : memref<3x8x128xf32, #tpu.memory_space<vmem>>, vector<1x8x128xf32>
    %1 = vector.shape_cast %0 : vector<1x8x128xf32> to vector<8x128xf32>
    %c0_2 = arith.constant 0 : index
    %2 = memref.load %arg2[%c0_2] : memref<4xf32, #tpu.memory_space<smem>>
    %3 = vector.broadcast %2 : f32 to vector<8x128xf32>
    %4 = arith.subf %1, %3 : vector<8x128xf32>
    %c1 = arith.constant 1 : index
    %c0_3 = arith.constant 0 : index
    %c0_4 = arith.constant 0 : index
    %5 = vector.load %arg1[%c1, %c0_3, %c0_4] : memref<3x8x128xf32, #tpu.memory_space<vmem>>, vector<1x8x128xf32>
    %6 = vector.shape_cast %5 : vector<1x8x128xf32> to vector<8x128xf32>
    %c1_5 = arith.constant 1 : index
    %7 = memref.load %arg2[%c1_5] : memref<4xf32, #tpu.memory_space<smem>>
    %8 = vector.broadcast %7 : f32 to vector<8x128xf32>
    %9 = arith.subf %6, %8 : vector<8x128xf32>
    %c2 = arith.constant 2 : index
    %c0_6 = arith.constant 0 : index
    %c0_7 = arith.constant 0 : index
    %10 = vector.load %arg1[%c2, %c0_6, %c0_7] : memref<3x8x128xf32, #tpu.memory_space<vmem>>, vector<1x8x128xf32>
    %11 = vector.shape_cast %10 : vector<1x8x128xf32> to vector<8x128xf32>
    %c2_8 = arith.constant 2 : index
    %12 = memref.load %arg2[%c2_8] : memref<4xf32, #tpu.memory_space<smem>>
    %13 = vector.broadcast %12 : f32 to vector<8x128xf32>
    %14 = arith.subf %11, %13 : vector<8x128xf32>
    %15 = arith.mulf %4, %4 : vector<8x128xf32>
    %16 = arith.mulf %9, %9 : vector<8x128xf32>
    %17 = arith.addf %15, %16 : vector<8x128xf32>
    %18 = arith.mulf %14, %14 : vector<8x128xf32>
    %19 = arith.addf %17, %18 : vector<8x128xf32>
    %20 = math.sqrt %19 : vector<8x128xf32>
    %c3 = arith.constant 3 : index
    %21 = memref.load %arg2[%c3] : memref<4xf32, #tpu.memory_space<smem>>
    %22 = vector.broadcast %21 : f32 to vector<8x128xf32>
    %23 = arith.subf %20, %22 : vector<8x128xf32>
    %c0_9 = arith.constant 0 : index
    %c0_10 = arith.constant 0 : index
    %24 = vector.load %arg3[%c0_9, %c0_10] : memref<8x128xf32, #tpu.memory_space<vmem>>, vector<8x128xf32>
    tpu.vector_store %arg3[%c0_9, %c0_10], %23 {strides = array<i32>} : memref<8x128xf32, #tpu.memory_space<vmem>>, vector<8x128xf32>,
    return
  }
  func.func @transform_0(%arg0: i32) -> (i32, i32, i32) {
    %c0_i32 = arith.constant 0 : i32
    %c0_i32_0 = arith.constant 0 : i32
    %c0_i32_1 = arith.constant 0 : i32
    return %c0_i32, %arg0, %c0_i32_0 : i32, i32, i32
  }
  func.func @transform_1(%arg0: i32) -> i32 {
    %c0_i32 = arith.constant 0 : i32
    %c0_i32_0 = arith.constant 0 : i32
    return %c0_i32 : i32
  }
  func.func @transform_2(%arg0: i32) -> (i32, i32) {
    %c0_i32 = arith.constant 0 : i32
    %c0_i32_0 = arith.constant 0 : i32
    return %arg0, %c0_i32 : i32, i32
  }
}

</mosaic_0001>

<llo_original>
// kernel: _sdf_distance.1
$region0: #{_sdf_distance.1}
  #allocation0 [shape = 'u32[]', space=smem, size = 0x4, offset = 0x4, fixed_abs, tag = 'smem constant byte address 0x4 - core index']
  #allocation1 [shape = 'u32[144,128]{1,0:T(1,128)}', space=vmem, size = 0x12000, scoped, tag = 'internal scratch']
  %s0 = inlined_call_operand.vmem [shape: f32[3,8,128], index: 0, kind: input, shape index: {}]
  %s1 = inlined_call_operand.vmem [shape: f32[4], index: 1, kind: input, shape index: {}]
  %s2 = inlined_call_operand.vmem [shape: f32[8,128], index: 2, kind: output, shape index: {}]
  %s3 = sld [smem:[#allocation0]]
  $region22: #{_sdf_distance.1} parent=0
    _
  %s5 = ssub.s32 1, %s3
  %s6 = scalar_select 0, %s5, %s3
  $region1: #{_sdf_distance.1} parent=0
    #allocation2 [shape = 'u8[512]{0}', space=smem, size = 0x200, scoped, tag = 'input window, operand 1, single buffered']
    #allocation3 [shape = 's32[1]{0}', space=sflag, size = 0x4, scoped, tag = 'scoped memory for _sdf_distance.1']
    %7 = vsyncpa [#allocation3], 0
    // Predicated region
    $region2: #{_sdf_distance.1} parent=1 // pred_check
      _
    $region3: #{_sdf_distance.1} parent=1 // pred_check_branch
      %9 = sbr.rel (0) target = $region5
    $region4: #{_sdf_distance.1} parent=1 // pred_region
      _
    $region5: #{_sdf_distance.1} parent=1 // pred_fallthru
      _
    // Predicated region
    $region6: #{_sdf_distance.1} parent=1 // pred_check
      _
    $region7: #{_sdf_distance.1} parent=1 // pred_check_branch
      %11 = sbr.rel (0) target = $region9
    $region8: #{_sdf_distance.1} parent=1 // pred_region
      %s13 = ssub.s32 16, 16
      %14 = vsyncadd [#allocation3], %s13
      %s16 = sshll.u32 %s1, 4
      %s17 = int_to_ptr.vmem [resolvable:$true] %s16
      %19 = dma.vmem_to_smem %s17, 16, [#allocation2], [#allocation3]
    $region9: #{_sdf_distance.1} parent=1 // pred_fallthru
      _
    // Predicated region
    $region10: #{_sdf_distance.1} parent=1 // pred_check
      _
    $region11: #{_sdf_distance.1} parent=1 // pred_check_branch
      %21 = sbr.rel (0) target = $region13
    $region12: #{_sdf_distance.1} parent=1 // pred_region
      %22 = dma.done [#allocation3], 16
    $region13: #{_sdf_distance.1} parent=1 // pred_fallthru
      _
    %23 = sfence
    %v24 = vld [vmem:[%s0] sm:$0xff]
    %s25 = sld [smem:[#allocation2]]
    %v26 = vstv %s25
    %v27 = vsub.f32 %v24, %v26
    %s28 = scalar_lea.vmem %s0, 8
    %v29 = vld [vmem:[%s28] sm:$0xff]
    %s30 = sld [smem:[#allocation2 + $0x1]]
    %v31 = vstv %s30
    %v32 = vsub.f32 %v29, %v31
    %s33 = scalar_lea.vmem %s0, 16
    %v34 = vld [vmem:[%s33] sm:$0xff]
    %s35 = sld [smem:[#allocation2 + $0x2]]
    %v36 = vstv %s35
    %v37 = vsub.f32 %v34, %v36
    %v38 = vmul.f32 %v27, %v27
    %v39 = vmul.f32 %v32, %v32
    %v40 = vadd.f32 %v38, %v39
    %v41 = vmul.f32 %v37, %v37
    %v42 = vadd.f32 %v40, %v41
    %v43 = vrsqrt.pop %v42
    %v44 = vmul.f32 %v42, %v43
    %vm45 = vcmp.eq.f32.partialorder %v42, inf
    %v46 = vsel %vm45, %v42, %v44
    %vm47 = vcmp.eq.f32.partialorder %v42, 0.0
    %v48 = vand.u32 %v42, 2147483648
    %v49 = vsel %vm47, %v48, %v46
    %s50 = sld [smem:[#allocation2 + $0x3]]
    %v51 = vstv %s50
    %v52 = vsub.f32 %v49, %v51
    %53 = vst [vmem:[%s2] sm:$0xff] %v52
    // Predicated region
    $region14: #{_sdf_distance.1} parent=1 // pred_check
      _
    $region15: #{_sdf_distance.1} parent=1 // pred_check_branch
      %55 = sbr.rel (0) target = $region17
    $region16: #{_sdf_distance.1} parent=1 // pred_region
      _
    $region17: #{_sdf_distance.1} parent=1 // pred_fallthru
      _
    // Predicated region
    $region18: #{_sdf_distance.1} parent=1 // pred_check
      _
    $region19: #{_sdf_distance.1} parent=1 // pred_check_branch
      %57 = sbr.rel (0) target = $region21
    $region20: #{_sdf_distance.1} parent=1 // pred_region
      _
    $region21: #{_sdf_distance.1} parent=1 // pred_fallthru
      _
    %58 = vsyncpa [#allocation3], 1

</llo_original>
